<compile_context>
chip_gen: v7x
topology: tpu7x:2x2x1
jax: 0.10.0
libtpu: 0.0.40
codegen_flags: <defaults>
</compile_context>

<pallas_src>
import functools

import jax
import jax.numpy as jnp
from jax.experimental import pallas as pl
from jax.experimental.pallas import tpu as pltpu


def _ceil_to(v, m):
    return -(-v // m) * m


def _fqe_kernel(xt_ref, w_in_ref, w2_ref, w3_ref, bias_ref, out_ref, xin_ref):
    f32 = jnp.float32
    wdt = w_in_ref.dtype
    D = xt_ref.shape[0] - 1          # feature rows; last row is pi
    H = w2_ref.shape[0]
    A = w3_ref.shape[0]

    # Packed f32 slab: [wa1 (16); ba1 (16); b_fused (H); bf2 (H); bf3 (A)], shape (.,1)
    wa1 = bias_ref[0:16, :]
    ba1 = bias_ref[16:32, :]
    b_f = bias_ref[32:32 + H, :]
    bf2 = bias_ref[32 + H:32 + 2 * H, :]
    bf3 = bias_ref[32 + 2 * H:32 + 2 * H + A, :]

    # action_net first layer: Linear(1,16) has K=1 -> broadcasted outer product
    # on the VPU (no MXU round trip).  f32 elementwise math (v5e VPU has no bf16).
    pi = xt_ref[D:D + 1, :].astype(f32)                    # (1, bb)
    h1 = jnp.maximum(wa1 * pi + ba1, 0.0)                  # (16, bb) f32

    # Build [x ; h1] in a VMEM scratch (sublane-aligned writes: D=32, 16 rows),
    # then ONE fused MXU pass against the stacked [W_x^T | W_a^T] weight.
    xin_ref[0:D, :] = xt_ref[0:D, :]
    xin_ref[D:D + 16, :] = h1.astype(wdt)

    h = jnp.dot(w_in_ref[...], xin_ref[...], preferred_element_type=f32)   # (H, bb)
    h = jnp.maximum(h + b_f, 0.0)

    h = jnp.dot(w2_ref[...], h.astype(wdt), preferred_element_type=f32) + bf2
    h = jnp.maximum(h, 0.0)                                                # (H, bb)

    # Dropout(0.2) -> identity (eval mode).
    # TODO(synk): training-mode dropout randomness is not replicated.
    out = jnp.dot(w3_ref[...], h.astype(wdt), preferred_element_type=f32) + bf3
    out_ref[...] = out.astype(out_ref.dtype)                               # (A, bb)


@functools.partial(jax.jit, static_argnames=("block_b", "compute_dtype"))
def fqe_forward(x, pi_s, params, *, block_b=2048, compute_dtype=jnp.bfloat16):
    """x: (B, in_dim) f32, pi_s: (B,) f32. Returns (B, action_size) f32."""
    f32 = jnp.float32
    B, D = x.shape
    H = params["wf2"].shape[0]
    A = params["wf3"].shape[1]

    # ---- fold the wa2 / wxa / wf1 linear chain once, outside the kernel ----
    wxa_x = params["wxa"][:D, :]
    wxa_a = params["wxa"][D:, :]
    W_x = wxa_x @ params["wf1"]                                   # (D, H)
    W_a = params["wa2"] @ wxa_a @ params["wf1"]                   # (16, H)
    b_f = ((params["ba2"] @ wxa_a + params["bxa"]) @ params["wf1"]
           + params["bf1"])                                       # (1, H)

    # ---- transposed (feature-major) weights: every layer is W^T @ X ----
    w_in = jnp.concatenate([W_x, W_a], axis=0).T.astype(compute_dtype)   # (H, D+16)
    w2t = params["wf2"].T.astype(compute_dtype)                          # (H, H)
    w3t = params["wf3"].T.astype(compute_dtype)                          # (A, H)

    # ---- pack all 1-column f32 arrays into one resident slab ----
    bias_pack = jnp.concatenate([
        params["wa1"].reshape(16, 1),
        params["ba1"].reshape(16, 1),
        b_f.reshape(H, 1),
        params["bf2"].reshape(H, 1),
        params["bf3"].reshape(A, 1),
    ], axis=0).astype(f32)                                               # (32+2H+A, 1)

    # ---- batch tiling on the lane axis (multiples of 128) ----
    bb = max(128, min(block_b, _ceil_to(B, 128)))
    bb = (bb // 128) * 128
    B_pad = _ceil_to(B, bb)
    if B_pad // bb == 1 and B > 128:
        # Single-tile grid: split in two so v7x megacore uses both TensorCores
        # (one extra ~0.35us grid step on v5e/v6e -> negligible).
        bb = _ceil_to(-(-B // 2), 128)
        B_pad = _ceil_to(B, bb)
    grid = (B_pad // bb,)

    # One fused layout pass: transpose x, append pi as an extra feature row,
    # zero-pad the batch (lane) axis so the grid divides evenly.  Padded
    # columns produce garbage that is sliced off below (output is tiny: A rows).
    xt = jnp.concatenate(
        [x.T.astype(compute_dtype),
         pi_s.astype(compute_dtype).reshape(1, B)], axis=0)              # (D+1, B)
    if B_pad != B:
        xt = jnp.pad(xt, ((0, 0), (0, B_pad - B)))

    itemsize = jnp.dtype(compute_dtype).itemsize
    weight_bytes = sum(int(a.size) * a.dtype.itemsize
                       for a in (w_in, w2t, w3t, bias_pack))
    cost = pl.CostEstimate(
        flops=2 * B_pad * ((D + 16) * H + H * H + H * A),
        transcendentals=0,
        bytes_accessed=int(B_pad * (D + 1) * itemsize    # xt
                           + B_pad * A * 4               # out
                           + weight_bytes),
    )

    def resident(a):   # full-array block, constant index -> stays in VMEM
        return pl.BlockSpec(a.shape, lambda i: (0, 0))

    out_t = pl.pallas_call(
        _fqe_kernel,
        out_shape=jax.ShapeDtypeStruct((A, B_pad), f32),
        grid=grid,
        in_specs=[
            pl.BlockSpec((D + 1, bb), lambda i: (0, i)),   # [x ; pi] batch tile
            resident(w_in),
            resident(w2t),
            resident(w3t),
            resident(bias_pack),
        ],
        out_specs=pl.BlockSpec((A, bb), lambda i: (0, i)),  # lane-dense output
        scratch_shapes=[pltpu.VMEM((D + 16, bb), compute_dtype)],
        compiler_params=pltpu.CompilerParams(
            dimension_semantics=("parallel",),              # megacore on v7x
            vmem_limit_bytes=32 * 1024 * 1024,
        ),
        cost_estimate=cost,
    )(xt, w_in, w2t, w3t, bias_pack)

    return out_t[:, :B].T.astype(f32)                       # (B, A)


def init_params(key, in_dim, action_size, n_nodes=64):
    """Deterministic init mimicking PyTorch Linear default (U[-1/sqrt(fan_in), +])."""
    def linear(key, fan_in, fan_out):
        kw, kb = jax.random.split(key)
        bound = 1.0 / jnp.sqrt(jnp.float32(fan_in))
        w = jax.random.uniform(kw, (fan_in, fan_out), jnp.float32, -bound, bound)
        b = jax.random.uniform(kb, (1, fan_out), jnp.float32, -bound, bound)
        return w, b

    keys = jax.random.split(key, 6)
    wa1, ba1 = linear(keys[0], 1, 16)
    wa2, ba2 = linear(keys[1], 16, in_dim)
    wxa, bxa = linear(keys[2], 2 * in_dim, in_dim)
    wf1, bf1 = linear(keys[3], in_dim, n_nodes)
    wf2, bf2 = linear(keys[4], n_nodes, n_nodes)
    wf3, bf3 = linear(keys[5], n_nodes, action_size)
    return dict(wa1=wa1, ba1=ba1, wa2=wa2, ba2=ba2, wxa=wxa, bxa=bxa,
                wf1=wf1, bf1=bf1, wf2=wf2, bf2=bf2, wf3=wf3, bf3=bf3)


def fqe_reference(x, pi_s, p):
    """Unfused reference mirroring the PyTorch module (eval-mode dropout)."""
    pi = pi_s.astype(jnp.float32).reshape(-1, 1)
    h = jnp.maximum(pi @ p["wa1"] + p["ba1"], 0.0)
    a = h @ p["wa2"] + p["ba2"]
    xc = jnp.concatenate([x, a], axis=1)
    phi = xc @ p["wxa"] + p["bxa"]
    h = jnp.maximum(phi @ p["wf1"] + p["bf1"], 0.0)
    h = jnp.maximum(h @ p["wf2"] + p["bf2"], 0.0)
    return h @ p["wf3"] + p["bf3"]


if __name__ == "__main__":
    IN_DIM, ACTION_SIZE, N_NODES = 32, 4, 64

    key = jax.random.PRNGKey(0)
    k_x, k_pi, k_p, k_x2, k_pi2 = jax.random.split(key, 5)
    params = init_params(k_p, IN_DIM, ACTION_SIZE, N_NODES)

    # Small single-tile case, exact f32 compute path.
    B = 8
    x = jax.random.normal(k_x, (B, IN_DIM), jnp.float32)
    pi_s = jax.random.randint(k_pi, (B,), 0, ACTION_SIZE).astype(jnp.float32)
    out = jax.block_until_ready(
        fqe_forward(x, pi_s, params, compute_dtype=jnp.float32))
    ref = fqe_reference(x, pi_s, params)
    assert out.shape == (B, ACTION_SIZE)
    assert jnp.allclose(out, ref, atol=1e-3, rtol=1e-3)

    # Multi-tile ragged batch (exercises grid split + lane padding), f32 path.
    B2 = 300
    x2 = jax.random.normal(k_x2, (B2, IN_DIM), jnp.float32)
    pi2 = jax.random.randint(k_pi2, (B2,), 0, ACTION_SIZE).astype(jnp.float32)
    out2 = jax.block_until_ready(
        fqe_forward(x2, pi2, params, block_b=256, compute_dtype=jnp.float32))
    ref2 = fqe_reference(x2, pi2, params)
    assert out2.shape == (B2, ACTION_SIZE)
    assert jnp.allclose(out2, ref2, atol=1e-3, rtol=1e-3)

    # Default path: bf16 inputs/weights, f32 accumulate (looser tolerance).
    out_bf = jax.block_until_ready(fqe_forward(x2, pi2, params))
    assert out_bf.shape == (B2, ACTION_SIZE)
    assert jnp.allclose(out_bf, ref2, atol=1e-1, rtol=1e-1)

    print("KERNEL_OK")
</pallas_src>

<mosaic_0001>
module attributes {stable_mosaic.version = 11 : i64} {
  func.func @_fqe_kernel(%arg0: i32, %arg1: memref<33x128xf32, #tpu.memory_space<vmem>>, %arg2: memref<64x48xf32, #tpu.memory_space<vmem>>, %arg3: memref<64x64xf32, #tpu.memory_space<vmem>>, %arg4: memref<4x64xf32, #tpu.memory_space<vmem>>, %arg5: memref<164x1xf32, #tpu.memory_space<vmem>>, %arg6: memref<4x128xf32, #tpu.memory_space<vmem>>, %arg7: memref<48x128xf32, #tpu.memory_space<vmem>>) attributes {dimension_semantics = [#tpu.dimension_semantics<parallel>], iteration_bounds = array<i64: 1>, scalar_prefetch = 0 : i64, scratch_operands = 1 : i64, tpu.core_type = #tpu.core_type<tc>, window_params = [{transform_indices = @transform_0, window_bounds = array<i64: 33, 128>}, {pipeline_mode = #tpu.pipeline_mode<synchronous>, transform_indices = @transform_1, window_bounds = array<i64: 64, 48>}, {pipeline_mode = #tpu.pipeline_mode<synchronous>, transform_indices = @transform_2, window_bounds = array<i64: 64, 64>}, {pipeline_mode = #tpu.pipeline_mode<synchronous>, transform_indices = @transform_3, window_bounds = array<i64: 4, 64>}, {pipeline_mode = #tpu.pipeline_mode<synchronous>, transform_indices = @transform_4, window_bounds = array<i64: 164, 1>}, {transform_indices = @transform_5, window_bounds = array<i64: 4, 128>}]} {
    %c0 = arith.constant 0 : index
    %c0_0 = arith.constant 0 : index
    %0 = vector.load %arg5[%c0, %c0_0] : memref<164x1xf32, #tpu.memory_space<vmem>>, vector<16x1xf32>
    %c16 = arith.constant 16 : index
    %c0_1 = arith.constant 0 : index
    %1 = vector.load %arg5[%c16, %c0_1] : memref<164x1xf32, #tpu.memory_space<vmem>>, vector<16x1xf32>
    %c32 = arith.constant 32 : index
    %c0_2 = arith.constant 0 : index
    %2 = vector.load %arg5[%c32, %c0_2] : memref<164x1xf32, #tpu.memory_space<vmem>>, vector<64x1xf32>
    %c96 = arith.constant 96 : index
    %c0_3 = arith.constant 0 : index
    %3 = vector.load %arg5[%c96, %c0_3] : memref<164x1xf32, #tpu.memory_space<vmem>>, vector<64x1xf32>
    %c160 = arith.constant 160 : index
    %c0_4 = arith.constant 0 : index
    %4 = vector.load %arg5[%c160, %c0_4] : memref<164x1xf32, #tpu.memory_space<vmem>>, vector<4x1xf32>
    %c32_5 = arith.constant 32 : index
    %c0_6 = arith.constant 0 : index
    %5 = vector.load %arg1[%c32_5, %c0_6] : memref<33x128xf32, #tpu.memory_space<vmem>>, vector<1x128xf32>
    %6 = vector.broadcast %0 : vector<16x1xf32> to vector<16x128xf32>
    %7 = vector.broadcast %5 : vector<1x128xf32> to vector<16x128xf32>
    %8 = arith.mulf %6, %7 : vector<16x128xf32>
    %9 = vector.broadcast %1 : vector<16x1xf32> to vector<16x128xf32>
    %10 = arith.addf %8, %9 : vector<16x128xf32>
    %cst = arith.constant 0.000000e+00 : f32
    %11 = vector.broadcast %cst : f32 to vector<16x128xf32>
    %12 = arith.maximumf %10, %11 : vector<16x128xf32>
    %c0_7 = arith.constant 0 : index
    %c0_8 = arith.constant 0 : index
    %13 = vector.load %arg1[%c0_7, %c0_8] : memref<33x128xf32, #tpu.memory_space<vmem>>, vector<32x128xf32>
    %c0_9 = arith.constant 0 : index
    %c0_10 = arith.constant 0 : index
    %14 = vector.load %arg7[%c0_9, %c0_10] : memref<48x128xf32, #tpu.memory_space<vmem>>, vector<32x128xf32>
    tpu.vector_store %arg7[%c0_9, %c0_10], %13 {strides = array<i32>} : memref<48x128xf32, #tpu.memory_space<vmem>>, vector<32x128xf32>,
    %c32_11 = arith.constant 32 : index
    %c0_12 = arith.constant 0 : index
    %15 = vector.load %arg7[%c32_11, %c0_12] : memref<48x128xf32, #tpu.memory_space<vmem>>, vector<16x128xf32>
    tpu.vector_store %arg7[%c32_11, %c0_12], %12 {strides = array<i32>} : memref<48x128xf32, #tpu.memory_space<vmem>>, vector<16x128xf32>,
    %c0_13 = arith.constant 0 : index
    %c0_14 = arith.constant 0 : index
    %16 = vector.load %arg2[%c0_13, %c0_14] : memref<64x48xf32, #tpu.memory_space<vmem>>, vector<64x48xf32>
    %c0_15 = arith.constant 0 : index
    %c0_16 = arith.constant 0 : index
    %17 = vector.load %arg7[%c0_15, %c0_16] : memref<48x128xf32, #tpu.memory_space<vmem>>, vector<48x128xf32>
    %cst_17 = arith.constant dense<0.000000e+00> : vector<64x128xf32>
    %18 = tpu.matmul %16, %17, %cst_17 {dimension_numbers = #tpu.dot_dimension_numbers<[1], [0], [0], [1], [0, 0, 1, 1], [], []>} : vector<64x48xf32>, vector<48x128xf32>, vector<64x128xf32> -> vector<64x128xf32>
    %19 = vector.broadcast %2 : vector<64x1xf32> to vector<64x128xf32>
    %20 = arith.addf %18, %19 : vector<64x128xf32>
    %cst_18 = arith.constant 0.000000e+00 : f32
    %21 = vector.broadcast %cst_18 : f32 to vector<64x128xf32>
    %22 = arith.maximumf %20, %21 : vector<64x128xf32>
    %c0_19 = arith.constant 0 : index
    %c0_20 = arith.constant 0 : index
    %23 = vector.load %arg3[%c0_19, %c0_20] : memref<64x64xf32, #tpu.memory_space<vmem>>, vector<64x64xf32>
    %cst_21 = arith.constant dense<0.000000e+00> : vector<64x128xf32>
    %24 = tpu.matmul %23, %22, %cst_21 {dimension_numbers = #tpu.dot_dimension_numbers<[1], [0], [0], [1], [0, 0, 1, 1], [], []>} : vector<64x64xf32>, vector<64x128xf32>, vector<64x128xf32> -> vector<64x128xf32>
    %25 = vector.broadcast %3 : vector<64x1xf32> to vector<64x128xf32>
    %26 = arith.addf %24, %25 : vector<64x128xf32>
    %cst_22 = arith.constant 0.000000e+00 : f32
    %27 = vector.broadcast %cst_22 : f32 to vector<64x128xf32>
    %28 = arith.maximumf %26, %27 : vector<64x128xf32>
    %c0_23 = arith.constant 0 : index
    %c0_24 = arith.constant 0 : index
    %29 = vector.load %arg4[%c0_23, %c0_24] : memref<4x64xf32, #tpu.memory_space<vmem>>, vector<4x64xf32>
    %cst_25 = arith.constant dense<0.000000e+00> : vector<4x128xf32>
    %30 = tpu.matmul %29, %28, %cst_25 {dimension_numbers = #tpu.dot_dimension_numbers<[1], [0], [0], [1], [0, 0, 1, 1], [], []>} : vector<4x64xf32>, vector<64x128xf32>, vector<4x128xf32> -> vector<4x128xf32>
    %31 = vector.broadcast %4 : vector<4x1xf32> to vector<4x128xf32>
    %32 = arith.addf %30, %31 : vector<4x128xf32>
    %c0_26 = arith.constant 0 : index
    %c0_27 = arith.constant 0 : index
    %33 = vector.load %arg6[%c0_26, %c0_27] : memref<4x128xf32, #tpu.memory_space<vmem>>, vector<4x128xf32>
    tpu.vector_store %arg6[%c0_26, %c0_27], %32 {strides = array<i32>} : memref<4x128xf32, #tpu.memory_space<vmem>>, vector<4x128xf32>,
    return
  }
  func.func @transform_0(%arg0: i32) -> (i32, i32) {
    %c0_i32 = arith.constant 0 : i32
    %c0_i32_0 = arith.constant 0 : i32
    return %c0_i32, %arg0 : i32, i32
  }
  func.func @transform_1(%arg0: i32) -> (i32, i32) {
    %c0_i32 = arith.constant 0 : i32
    %c0_i32_0 = arith.constant 0 : i32
    %c0_i32_1 = arith.constant 0 : i32
    return %c0_i32, %c0_i32_0 : i32, i32
  }
  func.func @transform_2(%arg0: i32) -> (i32, i32) {
    %c0_i32 = arith.constant 0 : i32
    %c0_i32_0 = arith.constant 0 : i32
    %c0_i32_1 = arith.constant 0 : i32
    return %c0_i32, %c0_i32_0 : i32, i32
  }
  func.func @transform_3(%arg0: i32) -> (i32, i32) {
    %c0_i32 = arith.constant 0 : i32
    %c0_i32_0 = arith.constant 0 : i32
    %c0_i32_1 = arith.constant 0 : i32
    return %c0_i32, %c0_i32_0 : i32, i32
  }
  func.func @transform_4(%arg0: i32) -> (i32, i32) {
    %c0_i32 = arith.constant 0 : i32
    %c0_i32_0 = arith.constant 0 : i32
    %c0_i32_1 = arith.constant 0 : i32
    return %c0_i32, %c0_i32_0 : i32, i32
  }
  func.func @transform_5(%arg0: i32) -> (i32, i32) {
    %c0_i32 = arith.constant 0 : i32
    %c0_i32_0 = arith.constant 0 : i32
    return %c0_i32, %arg0 : i32, i32
  }
}

</mosaic_0001>

<llo_original>
// kernel: fqe_forward.1
$region0: #{fqe_forward.1}
  #allocation0 [shape = 'u32[]', space=smem, size = 0x4, offset = 0x4, fixed_abs, tag = 'smem constant byte address 0x4 - core index']
  #allocation1 [shape = 'u32[144,128]{1,0:T(1,128)}', space=vmem, size = 0x12000, scoped, tag = 'internal scratch']
  #allocation2 [shape = 'f32[48,128]{1,0:T(8,128)}', space=vmem, size = 0x6000, scoped, tag = 'scratch operand']
  %s0 = inlined_call_operand.vmem [shape: f32[33,128], index: 0, kind: input, shape index: {}]
  %s1 = inlined_call_operand.vmem [shape: f32[64,48], index: 1, kind: input, shape index: {}]
  %s2 = inlined_call_operand.vmem [shape: f32[64,64], index: 2, kind: input, shape index: {}]
  %s3 = inlined_call_operand.vmem [shape: f32[4,64], index: 3, kind: input, shape index: {}]
  %s4 = inlined_call_operand.vmem [shape: f32[164,1], index: 4, kind: input, shape index: {}]
  %s5 = inlined_call_operand.vmem [shape: f32[4,128], index: 5, kind: output, shape index: {}]
  %s6 = sld [smem:[#allocation0]]
  $region30: #{fqe_forward.1} parent=0
    _
  %s8 = ssub.s32 1, %s6
  %s9 = scalar_select 0, %s8, %s6
  // Predicated region
  $region2: #{fqe_forward.1} parent=0 // pred_check
    _
  $region3: #{fqe_forward.1} parent=0 // pred_check_branch
    %11 = sbr.rel (0) target = $region5
  $region4: #{fqe_forward.1} parent=0 // pred_region
    _
  $region5: #{fqe_forward.1} parent=0 // pred_fallthru
    _
  // Predicated region
  $region6: #{fqe_forward.1} parent=0 // pred_check
    _
  $region7: #{fqe_forward.1} parent=0 // pred_check_branch
    %13 = sbr.rel (0) target = $region9
  $region8: #{fqe_forward.1} parent=0 // pred_region
    _
  $region9: #{fqe_forward.1} parent=0 // pred_fallthru
    _
  // Predicated region
  $region10: #{fqe_forward.1} parent=0 // pred_check
    _
  $region11: #{fqe_forward.1} parent=0 // pred_check_branch
    %15 = sbr.rel (0) target = $region13
  $region12: #{fqe_forward.1} parent=0 // pred_region
    _
  $region13: #{fqe_forward.1} parent=0 // pred_fallthru
    _
  // Predicated region
  $region14: #{fqe_forward.1} parent=0 // pred_check
    _
  $region15: #{fqe_forward.1} parent=0 // pred_check_branch
    %17 = sbr.rel (0) target = $region17
  $region16: #{fqe_forward.1} parent=0 // pred_region
    _
  $region17: #{fqe_forward.1} parent=0 // pred_fallthru
    _
  // Predicated region
  $region18: #{fqe_forward.1} parent=0 // pred_check
    _
  $region19: #{fqe_forward.1} parent=0 // pred_check_branch
    %19 = sbr.rel (0) target = $region21
  $region20: #{fqe_forward.1} parent=0 // pred_region
    _
  $region21: #{fqe_forward.1} parent=0 // pred_fallthru
    _
  %v20 = vld [vmem:[%s4] sm:$0xff]
  %v21 = vld [vmem:[%s4 + $0x8] sm:$0xff]
  %v22 = vld [vmem:[%s4 + $0x10] sm:$0xff]
  %v23 = vld [vmem:[%s4 + $0x18] sm:$0xff]
  %v24 = vld [vmem:[%s4 + $0x20] sm:$0xff]
  %v25 = vld [vmem:[%s4 + $0x28] sm:$0xff]
  %v26 = vld [vmem:[%s4 + $0x30] sm:$0xff]
  %v27 = vld [vmem:[%s4 + $0x38] sm:$0xff]
  %v28 = vld [vmem:[%s4 + $0x40] sm:$0xff]
  %v29 = vld [vmem:[%s4 + $0x48] sm:$0xff]
  %v30 = vld [vmem:[%s4 + $0x50] sm:$0xff]
  %v31 = vld [vmem:[%s4 + $0x58] sm:$0xff]
  %v32 = vld [vmem:[%s4 + $0x60] sm:$0xff]
  %v33 = vld [vmem:[%s4 + $0x68] sm:$0xff]
  %v34 = vld [vmem:[%s4 + $0x70] sm:$0xff]
  %v35 = vld [vmem:[%s4 + $0x78] sm:$0xff]
  %v36 = vld [vmem:[%s4 + $0x80] sm:$0xff]
  %v37 = vld [vmem:[%s4 + $0x88] sm:$0xff]
  %v38 = vld [vmem:[%s4 + $0x90] sm:$0xff]
  %v39 = vld [vmem:[%s4 + $0x98] sm:$0xff]
  %v40 = vld [vmem:[%s4 + $0xa0] sm:$0xf]
  %v41 = vld [vmem:[%s0 + $0x20] sm:$0x1]
  %43 = vset.pattern.permute.xlu0 0
  %44 = vperm.xlu0 %43, %v20
  %v45 = vpop.permute.xlu0 %44
  %48 = vset.pattern.permute.xlu0 0
  %49 = vperm.xlu0 %48, %v21
  %v50 = vpop.permute.xlu0 %49
  %v52 = vlaneseq
  %v53 = vshrl.u32 %v52, 7
  %v54 = vsub.s32 0, %v53
  %v55 = vrot.slane %v41, %v54
  %v56 = vmul.f32 %v45, %v55
  %v57 = vmul.f32 %v50, %v55
  %59 = vset.pattern.permute.xlu0 0
  %60 = vperm.xlu0 %59, %v22
  %v61 = vpop.permute.xlu0 %60
  %64 = vset.pattern.permute.xlu0 0
  %65 = vperm.xlu0 %64, %v23
  %v66 = vpop.permute.xlu0 %65
  %v68 = vadd.f32 %v56, %v61
  %v69 = vadd.f32 %v57, %v66
  %v70 = vmax.f32 %v68, 0.0
  %v71 = vmax.f32 %v69, 0.0
  %v72 = vld [vmem:[%s0] sm:$0xff]
  %v73 = vld [vmem:[%s0 + $0x8] sm:$0xff]
  %v74 = vld [vmem:[%s0 + $0x10] sm:$0xff]
  %v75 = vld [vmem:[%s0 + $0x18] sm:$0xff]
  %76 = vst [vmem:[#allocation2] sm:$0xff] %v72
  %77 = vst [vmem:[#allocation2 + $0x8] sm:$0xff] %v73
  %78 = vst [vmem:[#allocation2 + $0x10] sm:$0xff] %v74
  %79 = vst [vmem:[#allocation2 + $0x18] sm:$0xff] %v75
  %80 = vst [vmem:[#allocation2 + $0x20] sm:$0xff] %v70
  %81 = vst [vmem:[#allocation2 + $0x28] sm:$0xff] %v71
  %v82 = vld [vmem:[%s1] sm:$0xff]
  %v83 = vld [vmem:[%s1 + $0x8] sm:$0xff]
  %v84 = vld [vmem:[%s1 + $0x10] sm:$0xff]
  %v85 = vld [vmem:[%s1 + $0x18] sm:$0xff]
  %v86 = vld [vmem:[%s1 + $0x20] sm:$0xff]
  %v87 = vld [vmem:[%s1 + $0x28] sm:$0xff]
  %v88 = vld [vmem:[%s1 + $0x30] sm:$0xff]
  %v89 = vld [vmem:[%s1 + $0x38] sm:$0xff]
  %v90 = vld [vmem:[#allocation2] sm:$0xff]
  %v91 = vld [vmem:[#allocation2 + $0x8] sm:$0xff]
  %v92 = vld [vmem:[#allocation2 + $0x10] sm:$0xff]
  %v93 = vld [vmem:[#allocation2 + $0x18] sm:$0xff]
  %v94 = vld [vmem:[#allocation2 + $0x20] sm:$0xff]
  %v95 = vld [vmem:[#allocation2 + $0x28] sm:$0xff]
  %97 = vset.pattern.permute.xlu0 0
  %98 = vperm.xlu0 %97, %v24
  %v99 = vpop.permute.xlu0 %98
  %102 = vset.pattern.permute.xlu0 0
  %103 = vperm.xlu0 %102, %v25
  %v104 = vpop.permute.xlu0 %103
  %107 = vset.pattern.permute.xlu0 0
  %108 = vperm.xlu0 %107, %v26
  %v109 = vpop.permute.xlu0 %108
  %112 = vset.pattern.permute.xlu0 0
  %113 = vperm.xlu0 %112, %v27
  %v114 = vpop.permute.xlu0 %113
  %117 = vset.pattern.permute.xlu0 0
  %118 = vperm.xlu0 %117, %v28
  %v119 = vpop.permute.xlu0 %118
  %122 = vset.pattern.permute.xlu0 0
  %123 = vperm.xlu0 %122, %v29
  %v124 = vpop.permute.xlu0 %123
  %127 = vset.pattern.permute.xlu0 0
  %128 = vperm.xlu0 %127, %v30
  %v129 = vpop.permute.xlu0 %128
  %132 = vset.pattern.permute.xlu0 0
  %133 = vperm.xlu0 %132, %v31
  %v134 = vpop.permute.xlu0 %133
  %vm136 = vcmask 392192
  %v138 = vsel %vm136, %v82, 0
  %v141 = vsel %vm136, %v83, 0
  %v144 = vsel %vm136, %v84, 0
  %v147 = vsel %vm136, %v85, 0
  %v150 = vsel %vm136, %v86, 0
  %v153 = vsel %vm136, %v87, 0
  %v156 = vsel %vm136, %v88, 0
  %v159 = vsel %vm136, %v89, 0
  %161 = vmatprep.subr.mxu0 0.0
  %162 = vmatpush1.msra.mxu0 %v90
  %163 = vmatprep.subr.mxu0 0.0
  %164 = vmatpush1.msra.mxu0 %v91
  %165 = vmatprep.subr.mxu0 0.0
  %166 = vmatpush1.msra.mxu0 %v92
  %167 = vmatprep.subr.mxu0 0.0
  %168 = vmatpush1.msra.mxu0 %v93
  %169 = vmatprep.subr.mxu0 0.0
  %170 = vmatpush1.msra.mxu0 %v94
  %171 = vmatprep.subr.mxu0 0.0
  %172 = vmatpush1.msra.mxu0 %v95
  %173 = vmatprep.subr.mxu0 0.0
  %174 = vmatpush1.msra.mxu0 0.0
  %175 = vmatprep.subr.mxu0 0.0
  %176 = vmatpush1.msra.mxu0 0.0
  %177 = vmatprep.subr.mxu0 0.0
  %178 = vmatpush1.msra.mxu0 0.0
  %179 = vmatprep.subr.mxu0 0.0
  %180 = vmatpush1.msra.mxu0 0.0
  %181 = vmatprep.subr.mxu0 0.0
  %182 = vmatpush1.msra.mxu0 0.0
  %183 = vmatprep.subr.mxu0 0.0
  %184 = vmatpush1.msra.mxu0 0.0
  %185 = vmatprep.subr.mxu0 0.0
  %186 = vmatpush1.msra.mxu0 0.0
  %187 = vmatprep.subr.mxu0 0.0
  %188 = vmatpush1.msra.mxu0 0.0
  %189 = vmatprep.subr.mxu0 0.0
  %190 = vmatpush1.msra.mxu0 0.0
  %191 = vmatprep.subr.mxu0 0.0
  %192 = vmatpush1.msra.mxu0 0.0
  %193 = vmatprep.subr.mxu0 0.0
  %194 = vmatpush1.msra.mxu0 0.0
  %195 = vmatprep.subr.mxu0 0.0
  %196 = vmatpush1.msra.mxu0 0.0
  %197 = vmatprep.subr.mxu0 0.0
  %198 = vmatpush1.msra.mxu0 0.0
  %199 = vmatprep.subr.mxu0 0.0
  %200 = vmatpush1.msra.mxu0 0.0
  %201 = vmatprep.subr.mxu0 0.0
  %202 = vmatpush1.msra.mxu0 0.0
  %203 = vmatprep.subr.mxu0 0.0
  %204 = vmatpush1.msra.mxu0 0.0
  %205 = vmatprep.subr.mxu0 0.0
  %206 = vmatpush1.msra.mxu0 0.0
  %207 = vmatprep.subr.mxu0 0.0
  %208 = vmatpush1.msra.mxu0 0.0
  %209 = vmatprep.subr.mxu0 0.0
  %210 = vmatpush1.msra.mxu0 0.0
  %211 = vmatprep.subr.mxu0 0.0
  %212 = vmatpush1.msra.mxu0 0.0
  %213 = vmatprep.subr.mxu0 0.0
  %214 = vmatpush1.msra.mxu0 0.0
  %215 = vmatprep.subr.mxu0 0.0
  %216 = vmatpush1.msra.mxu0 0.0
  %217 = vmatprep.subr.mxu0 0.0
  %218 = vmatpush1.msra.mxu0 0.0
  %219 = vmatprep.subr.mxu0 0.0
  %220 = vmatpush1.msra.mxu0 0.0
  %221 = vmatprep.subr.mxu0 0.0
  %222 = vmatpush1.msra.mxu0 0.0
  %223 = vmatprep.subr.mxu0 0.0
  %224 = vmatpush1.msra.mxu0 0.0
  %225 = vmatprep.mubr.f32.mxu0 0.0
  %226 = vmatmul.mubr.f32.gmra.mrb[0].mxu0 %v138
  %v227 = vpop.f32.mrb[0].mxu0
  %v228 = vadd.f32 %v99, %v227
  %v229 = vpop.f32.mrb[0].mxu0
  %230 = vmatprep.mubr.f32.mxu0 0.0
  %231 = vmatmul.mubr.f32.gmra.mrb[0].mxu0 %v141
  %v232 = vpop.f32.mrb[0].mxu0
  %v233 = vadd.f32 %v104, %v232
  %v234 = vpop.f32.mrb[0].mxu0
  %235 = vmatprep.mubr.f32.mxu0 0.0
  %236 = vmatmul.mubr.f32.gmra.mrb[0].mxu0 %v144
  %v237 = vpop.f32.mrb[0].mxu0
  %v238 = vadd.f32 %v109, %v237
  %v239 = vpop.f32.mrb[0].mxu0
  %240 = vmatprep.mubr.f32.mxu0 0.0
  %241 = vmatmul.mubr.f32.gmra.mrb[0].mxu0 %v147
  %v242 = vpop.f32.mrb[0].mxu0
  %v243 = vadd.f32 %v114, %v242
  %v244 = vpop.f32.mrb[0].mxu0
  %245 = vmatprep.mubr.f32.mxu0 0.0
  %246 = vmatmul.mubr.f32.gmra.mrb[0].mxu0 %v150
  %v247 = vpop.f32.mrb[0].mxu0
  %v248 = vadd.f32 %v119, %v247
  %v249 = vpop.f32.mrb[0].mxu0
  %250 = vmatprep.mubr.f32.mxu0 0.0
  %251 = vmatmul.mubr.f32.gmra.mrb[0].mxu0 %v153
  %v252 = vpop.f32.mrb[0].mxu0
  %v253 = vadd.f32 %v124, %v252
  %v254 = vpop.f32.mrb[0].mxu0
  %255 = vmatprep.mubr.f32.mxu0 0.0
  %256 = vmatmul.mubr.f32.gmra.mrb[0].mxu0 %v156
  %v257 = vpop.f32.mrb[0].mxu0
  %v258 = vadd.f32 %v129, %v257
  %v259 = vpop.f32.mrb[0].mxu0
  %260 = vmatprep.mubr.f32.mxu0 0.0
  %261 = vmatmul.mubr.f32.gmra.mrb[0].mxu0 %v159
  %v262 = vpop.f32.mrb[0].mxu0
  %v263 = vadd.f32 %v134, %v262
  %v264 = vpop.f32.mrb[0].mxu0
  %265 = vdwg.mxu0
  %v266 = vmax.f32 %v228, 0.0
  %v267 = vmax.f32 %v233, 0.0
  %v268 = vmax.f32 %v238, 0.0
  %v269 = vmax.f32 %v243, 0.0
  %v270 = vmax.f32 %v248, 0.0
  %v271 = vmax.f32 %v253, 0.0
  %v272 = vmax.f32 %v258, 0.0
  %v273 = vmax.f32 %v263, 0.0
  %v274 = vld [vmem:[%s2] sm:$0xff]
  %v275 = vld [vmem:[%s2 + $0x8] sm:$0xff]
  %v276 = vld [vmem:[%s2 + $0x10] sm:$0xff]
  %v277 = vld [vmem:[%s2 + $0x18] sm:$0xff]
  %v278 = vld [vmem:[%s2 + $0x20] sm:$0xff]
  %v279 = vld [vmem:[%s2 + $0x28] sm:$0xff]
  %v280 = vld [vmem:[%s2 + $0x30] sm:$0xff]
  %v281 = vld [vmem:[%s2 + $0x38] sm:$0xff]
  %283 = vset.pattern.permute.xlu0 0
  %284 = vperm.xlu0 %283, %v32
  %v285 = vpop.permute.xlu0 %284
  %288 = vset.pattern.permute.xlu0 0
  %289 = vperm.xlu0 %288, %v33
  %v290 = vpop.permute.xlu0 %289
  %293 = vset.pattern.permute.xlu0 0
  %294 = vperm.xlu0 %293, %v34
  %v295 = vpop.permute.xlu0 %294
  %298 = vset.pattern.permute.xlu0 0
  %299 = vperm.xlu0 %298, %v35
  %v300 = vpop.permute.xlu0 %299
  %303 = vset.pattern.permute.xlu0 0
  %304 = vperm.xlu0 %303, %v36
  %v305 = vpop.permute.xlu0 %304
  %308 = vset.pattern.permute.xlu0 0
  %309 = vperm.xlu0 %308, %v37
  %v310 = vpop.permute.xlu0 %309
  %313 = vset.pattern.permute.xlu0 0
  %314 = vperm.xlu0 %313, %v38
  %v315 = vpop.permute.xlu0 %314
  %318 = vset.pattern.permute.xlu0 0
  %319 = vperm.xlu0 %318, %v39
  %v320 = vpop.permute.xlu0 %319
  %vm322 = vcmask 523264
  %v324 = vsel %vm322, %v274, 0
  %v327 = vsel %vm322, %v275, 0
  %v330 = vsel %vm322, %v276, 0
  %v333 = vsel %vm322, %v277, 0
  %v336 = vsel %vm322, %v278, 0
  %v339 = vsel %vm322, %v279, 0
  %v342 = vsel %vm322, %v280, 0
  %v345 = vsel %vm322, %v281, 0
  %347 = vmatprep.subr.mxu0 0.0
  %348 = vmatpush1.msra.mxu0 %v266
  %349 = vmatprep.subr.mxu0 0.0
  %350 = vmatpush1.msra.mxu0 %v267
  %351 = vmatprep.subr.mxu0 0.0
  %352 = vmatpush1.msra.mxu0 %v268
  %353 = vmatprep.subr.mxu0 0.0
  %354 = vmatpush1.msra.mxu0 %v269
  %355 = vmatprep.subr.mxu0 0.0
  %356 = vmatpush1.msra.mxu0 %v270
  %357 = vmatprep.subr.mxu0 0.0
  %358 = vmatpush1.msra.mxu0 %v271
  %359 = vmatprep.subr.mxu0 0.0
  %360 = vmatpush1.msra.mxu0 %v272
  %361 = vmatprep.subr.mxu0 0.0
  %362 = vmatpush1.msra.mxu0 %v273
  %363 = vmatprep.subr.mxu0 0.0
  %364 = vmatpush1.msra.mxu0 0.0
  %365 = vmatprep.subr.mxu0 0.0
  %366 = vmatpush1.msra.mxu0 0.0
  %367 = vmatprep.subr.mxu0 0.0
  %368 = vmatpush1.msra.mxu0 0.0
  %369 = vmatprep.subr.mxu0 0.0
  %370 = vmatpush1.msra.mxu0 0.0
  %371 = vmatprep.subr.mxu0 0.0
  %372 = vmatpush1.msra.mxu0 0.0
  %373 = vmatprep.subr.mxu0 0.0
  %374 = vmatpush1.msra.mxu0 0.0
  %375 = vmatprep.subr.mxu0 0.0
  %376 = vmatpush1.msra.mxu0 0.0
  %377 = vmatprep.subr.mxu0 0.0
  %378 = vmatpush1.msra.mxu0 0.0
  %379 = vmatprep.subr.mxu0 0.0
  %380 = vmatpush1.msra.mxu0 0.0
  %381 = vmatprep.subr.mxu0 0.0
  %382 = vmatpush1.msra.mxu0 0.0
  %383 = vmatprep.subr.mxu0 0.0
  %384 = vmatpush1.msra.mxu0 0.0
  %385 = vmatprep.subr.mxu0 0.0
  %386 = vmatpush1.msra.mxu0 0.0
  %387 = vmatprep.subr.mxu0 0.0
  %388 = vmatpush1.msra.mxu0 0.0
  %389 = vmatprep.subr.mxu0 0.0
  %390 = vmatpush1.msra.mxu0 0.0
  %391 = vmatprep.subr.mxu0 0.0
  %392 = vmatpush1.msra.mxu0 0.0
  %393 = vmatprep.subr.mxu0 0.0
  %394 = vmatpush1.msra.mxu0 0.0
  %395 = vmatprep.subr.mxu0 0.0
  %396 = vmatpush1.msra.mxu0 0.0
  %397 = vmatprep.subr.mxu0 0.0
  %398 = vmatpush1.msra.mxu0 0.0
  %399 = vmatprep.subr.mxu0 0.0
  %400 = vmatpush1.msra.mxu0 0.0
  %401 = vmatprep.subr.mxu0 0.0
  %402 = vmatpush1.msra.mxu0 0.0
  %403 = vmatprep.subr.mxu0 0.0
  %404 = vmatpush1.msra.mxu0 0.0
  %405 = vmatprep.subr.mxu0 0.0
  %406 = vmatpush1.msra.mxu0 0.0
  %407 = vmatprep.subr.mxu0 0.0
  %408 = vmatpush1.msra.mxu0 0.0
  %409 = vmatprep.subr.mxu0 0.0
  %410 = vmatpush1.msra.mxu0 0.0
  %411 = vmatprep.mubr.f32.mxu0 0.0
  %412 = vmatmul.mubr.f32.gmra.mrb[0].mxu0 %v324
  %v413 = vpop.f32.mrb[0].mxu0
  %v414 = vadd.f32 %v285, %v413
  %v415 = vpop.f32.mrb[0].mxu0
  %416 = vmatprep.mubr.f32.mxu0 0.0
  %417 = vmatmul.mubr.f32.gmra.mrb[0].mxu0 %v327
  %v418 = vpop.f32.mrb[0].mxu0
  %v419 = vadd.f32 %v290, %v418
  %v420 = vpop.f32.mrb[0].mxu0
  %421 = vmatprep.mubr.f32.mxu0 0.0
  %422 = vmatmul.mubr.f32.gmra.mrb[0].mxu0 %v330
  %v423 = vpop.f32.mrb[0].mxu0
  %v424 = vadd.f32 %v295, %v423
  %v425 = vpop.f32.mrb[0].mxu0
  %426 = vmatprep.mubr.f32.mxu0 0.0
  %427 = vmatmul.mubr.f32.gmra.mrb[0].mxu0 %v333
  %v428 = vpop.f32.mrb[0].mxu0
  %v429 = vadd.f32 %v300, %v428
  %v430 = vpop.f32.mrb[0].mxu0
  %431 = vmatprep.mubr.f32.mxu0 0.0
  %432 = vmatmul.mubr.f32.gmra.mrb[0].mxu0 %v336
  %v433 = vpop.f32.mrb[0].mxu0
  %v434 = vadd.f32 %v305, %v433
  %v435 = vpop.f32.mrb[0].mxu0
  %436 = vmatprep.mubr.f32.mxu0 0.0
  %437 = vmatmul.mubr.f32.gmra.mrb[0].mxu0 %v339
  %v438 = vpop.f32.mrb[0].mxu0
  %v439 = vadd.f32 %v310, %v438
  %v440 = vpop.f32.mrb[0].mxu0
  %441 = vmatprep.mubr.f32.mxu0 0.0
  %442 = vmatmul.mubr.f32.gmra.mrb[0].mxu0 %v342
  %v443 = vpop.f32.mrb[0].mxu0
  %v444 = vadd.f32 %v315, %v443
  %v445 = vpop.f32.mrb[0].mxu0
  %446 = vmatprep.mubr.f32.mxu0 0.0
  %447 = vmatmul.mubr.f32.gmra.mrb[0].mxu0 %v345
  %v448 = vpop.f32.mrb[0].mxu0
  %v449 = vadd.f32 %v320, %v448
  %v450 = vpop.f32.mrb[0].mxu0
  %451 = vdwg.mxu0
  %v452 = vmax.f32 %v414, 0.0
  %v453 = vmax.f32 %v419, 0.0
  %v454 = vmax.f32 %v424, 0.0
  %v455 = vmax.f32 %v429, 0.0
  %v456 = vmax.f32 %v434, 0.0
  %v457 = vmax.f32 %v439, 0.0
  %v458 = vmax.f32 %v444, 0.0
  %v459 = vmax.f32 %v449, 0.0
  %v460 = vld [vmem:[%s3] sm:$0xf]
  %462 = vset.pattern.permute.xlu0 0
  %463 = vperm.xlu0 %462, %v40
  %v464 = vpop.permute.xlu0 %463
  %v467 = vsel %vm322, %v460, 0
  %469 = vmatprep.subr.mxu0 0.0
  %470 = vmatpush1.msra.mxu0 %v452
  %471 = vmatprep.subr.mxu0 0.0
  %472 = vmatpush1.msra.mxu0 %v453
  %473 = vmatprep.subr.mxu0 0.0
  %474 = vmatpush1.msra.mxu0 %v454
  %475 = vmatprep.subr.mxu0 0.0
  %476 = vmatpush1.msra.mxu0 %v455
  %477 = vmatprep.subr.mxu0 0.0
  %478 = vmatpush1.msra.mxu0 %v456
  %479 = vmatprep.subr.mxu0 0.0
  %480 = vmatpush1.msra.mxu0 %v457
  %481 = vmatprep.subr.mxu0 0.0
  %482 = vmatpush1.msra.mxu0 %v458
  %483 = vmatprep.subr.mxu0 0.0
  %484 = vmatpush1.msra.mxu0 %v459
  %485 = vmatprep.subr.mxu0 0.0
  %486 = vmatpush1.msra.mxu0 0.0
  %487 = vmatprep.subr.mxu0 0.0
  %488 = vmatpush1.msra.mxu0 0.0
  %489 = vmatprep.subr.mxu0 0.0
  %490 = vmatpush1.msra.mxu0 0.0
  %491 = vmatprep.subr.mxu0 0.0
  %492 = vmatpush1.msra.mxu0 0.0
  %493 = vmatprep.subr.mxu0 0.0
  %494 = vmatpush1.msra.mxu0 0.0
  %495 = vmatprep.subr.mxu0 0.0
  %496 = vmatpush1.msra.mxu0 0.0
  %497 = vmatprep.subr.mxu0 0.0
  %498 = vmatpush1.msra.mxu0 0.0
  %499 = vmatprep.subr.mxu0 0.0
  %500 = vmatpush1.msra.mxu0 0.0
  %501 = vmatprep.subr.mxu0 0.0
  %502 = vmatpush1.msra.mxu0 0.0
  %503 = vmatprep.subr.mxu0 0.0
  %504 = vmatpush1.msra.mxu0 0.0
  %505 = vmatprep.subr.mxu0 0.0
  %506 = vmatpush1.msra.mxu0 0.0
  %507 = vmatprep.subr.mxu0 0.0
  %508 = vmatpush1.msra.mxu0 0.0
  %509 = vmatprep.subr.mxu0 0.0
  %510 = vmatpush1.msra.mxu0 0.0
  %511 = vmatprep.subr.mxu0 0.0
  %512 = vmatpush1.msra.mxu0 0.0
  %513 = vmatprep.subr.mxu0 0.0
  %514 = vmatpush1.msra.mxu0 0.0
  %515 = vmatprep.subr.mxu0 0.0
  %516 = vmatpush1.msra.mxu0 0.0
  %517 = vmatprep.subr.mxu0 0.0
  %518 = vmatpush1.msra.mxu0 0.0
  %519 = vmatprep.subr.mxu0 0.0
  %520 = vmatpush1.msra.mxu0 0.0
  %521 = vmatprep.subr.mxu0 0.0
  %522 = vmatpush1.msra.mxu0 0.0
  %523 = vmatprep.subr.mxu0 0.0
  %524 = vmatpush1.msra.mxu0 0.0
  %525 = vmatprep.subr.mxu0 0.0
  %526 = vmatpush1.msra.mxu0 0.0
  %527 = vmatprep.subr.mxu0 0.0
  %528 = vmatpush1.msra.mxu0 0.0
  %529 = vmatprep.subr.mxu0 0.0
  %530 = vmatpush1.msra.mxu0 0.0
  %531 = vmatprep.subr.mxu0 0.0
  %532 = vmatpush1.msra.mxu0 0.0
  %533 = vmatprep.mubr.f32.mxu0 0.0
  %534 = vmatmul.mubr.f32.gmra.mrb[0].mxu0 %v467
  %v535 = vpop.f32.mrb[0].mxu0
  %v536 = vadd.f32 %v464, %v535
  %v537 = vpop.f32.mrb[0].mxu0
  %538 = vdwg.mxu0
  %539 = vst [vmem:[%s5] sm:$0xf] %v536
  // Predicated region
  $region22: #{fqe_forward.1} parent=0 // pred_check
    _
  $region23: #{fqe_forward.1} parent=0 // pred_check_branch
    %541 = sbr.rel (0) target = $region25
  $region24: #{fqe_forward.1} parent=0 // pred_region
    _
  $region25: #{fqe_forward.1} parent=0 // pred_fallthru
    _
  // Predicated region
  $region26: #{fqe_forward.1} parent=0 // pred_check
    _
  $region27: #{fqe_forward.1} parent=0 // pred_check_branch
    %543 = sbr.rel (0) target = $region29
  $region28: #{fqe_forward.1} parent=0 // pred_region
    _
  $region29: #{fqe_forward.1} parent=0 // pred_fallthru
    _

</llo_original>
